<compile_context>
chip_gen: v5e
topology: v5e:2x2
jax: 0.10.0
libtpu: 0.0.40
codegen_flags: <defaults>
</compile_context>

<pallas_src>
import jax
import jax.numpy as jnp
import numpy as np
from jax.experimental import pallas as pl
from jax.experimental.pallas import tpu as pltpu


def ffm_kernel(idx_ref, table_ref, wrow_ref, bias_ref, out_ref):
    """One batch tile.

    idx_ref   : (TB, F)     int32  global feature indices (x + per-field offsets)
    table_ref : (V, 2*Wh)   bf16   pair-packed tables; left half = V_j masked to field-i rows,
                                   right half = V_i masked to field-j rows, per pair p=(i,j)
    wrow_ref  : (1, V)      f32    FeaturesLinear weights (kept f32)
    bias_ref  : (1,)        f32    FeaturesLinear bias (SMEM)
    out_ref   : (1, TB)     f32    sigmoid(linear + ffm), lane-dense
    """
    idx = idx_ref[...]
    TB, F = idx.shape
    V, W2 = table_ref.shape
    Wh = W2 // 2

    # Multi-hot over the shared vocabulary: per-field index ranges are disjoint, so summing the
    # F per-field one-hots yields an exact 0/1 row per sample (F ones).
    iota = jax.lax.broadcasted_iota(jnp.int32, (TB, V), 1)
    mh = jnp.zeros((TB, V), jnp.float32)
    for f in range(F):
        mh = mh + (idx[:, f:f + 1] == iota).astype(jnp.float32)

    # Single fused MXU gather: (TB, V) @ (V, 2*Wh) -> pair-packed L | R slabs, f32 accumulation.
    res = jnp.dot(mh.astype(jnp.bfloat16), table_ref[...],
                  preferred_element_type=jnp.float32)          # (TB, 2*Wh)
    left, right = res[:, :Wh], res[:, Wh:]                      # vreg-aligned 128-lane slabs
    ffm = jnp.sum(left * right, axis=-1)                        # one full-lane mul + one reduce

    # Linear term on the f32 path (no bf16 rounding of w): sum_f w[idx[b,f]].
    lin = jnp.sum(mh * wrow_ref[...], axis=-1)                  # (TB,)

    out_ref[0, :] = jax.nn.sigmoid(ffm + lin + bias_ref[0])


def _pick_tile_b(B, tile_b):
    """Batch tile: large for MXU/VALU occupancy, but >=2 tiles when B>128 (both v7x TCs busy),
    and a multiple of 128 whenever tiling so the (1, TB) output block stays lane-aligned."""
    TB = min(tile_b, B)
    if B > 128:
        TB = min(TB, pl.cdiv(B, 2))      # at least 2 batch tiles for the "parallel" axis
    if TB < B:
        TB = pl.cdiv(TB, 128) * 128      # lane-aligned tiles when actually tiling
    return TB


def _pack_pair_table(emb_tables, field_dims):
    """Build the (V, 2*Wh) bf16 pair-packed table.

    Left-half cols [p*D,(p+1)*D): table_j restricted (masked) to field i's vocabulary rows.
    Right-half cols            : table_i restricted to field j's vocabulary rows.
    A multi-hot gather of this table therefore yields the two interaction operand slabs directly.
    """
    F, V, D = emb_tables.shape
    pairs = [(i, j) for i in range(F) for j in range(i + 1, F)]
    Wh = max(128, pl.cdiv(len(pairs) * D, 128) * 128)           # lane-aligned half width
    offs = np.concatenate([[0], np.cumsum(field_dims)[:-1]]).astype(np.int64)
    fmask = np.zeros((F, V), np.float32)
    for f in range(F):
        fmask[f, offs[f]:offs[f] + field_dims[f]] = 1.0
    fmask = jnp.asarray(fmask)

    packed = jnp.zeros((V, 2 * Wh), jnp.float32)
    for p, (i, j) in enumerate(pairs):
        packed = packed.at[:, p * D:(p + 1) * D].set(emb_tables[j] * fmask[i][:, None])
        packed = packed.at[:, Wh + p * D:Wh + (p + 1) * D].set(emb_tables[i] * fmask[j][:, None])
    return packed.astype(jnp.bfloat16)


def ffm_forward(x_idx, wlin, bias, emb_tables, field_dims, *, tile_b=512):
    """Wrapper: offsets indices, pair-packs the tables, runs the tiled Pallas kernel."""
    F, V, D = emb_tables.shape
    B = x_idx.shape[0]

    offsets = jnp.asarray(np.concatenate([[0], np.cumsum(field_dims)[:-1]]), dtype=jnp.int32)
    idx = (x_idx + offsets[None, :]).astype(jnp.int32)

    packed = _pack_pair_table(emb_tables, field_dims)                 # (V, 2*Wh) bf16
    wrow = jnp.reshape(wlin[:, 0], (1, V)).astype(jnp.float32)        # (1, V)    f32
    bias_s = jnp.reshape(bias, (1,)).astype(jnp.float32)              # (1,)      SMEM scalar

    TB = _pick_tile_b(B, tile_b)
    ntiles = pl.cdiv(B, TB)
    B_pad = ntiles * TB
    if B_pad != B:
        # index 0 is always valid; padded rows are computed and discarded below.
        idx = jnp.pad(idx, ((0, B_pad - B), (0, 0)))

    out = pl.pallas_call(
        ffm_kernel,
        out_shape=jax.ShapeDtypeStruct((1, B_pad), jnp.float32),
        grid=(ntiles,),
        in_specs=[
            pl.BlockSpec((TB, F), lambda i: (i, 0)),                  # batch tile of indices
            pl.BlockSpec(packed.shape, lambda i: (0, 0)),             # pair-packed table (VMEM)
            pl.BlockSpec((1, V), lambda i: (0, 0)),                   # f32 linear weights
            pl.BlockSpec(memory_space=pltpu.MemorySpace.SMEM),        # scalar bias
        ],
        out_specs=pl.BlockSpec((1, TB), lambda i: (0, i)),            # lane-dense output
        compiler_params=pltpu.CompilerParams(
            dimension_semantics=("parallel",),                        # batch axis: megacore on v7x
        ),
    )(idx, packed, wrow, bias_s)
    return out[0, :B]


def ffm_reference(x_idx, wlin, bias, emb_tables, offsets):
    """Pure-JAX f32 reference matching the PyTorch module semantics."""
    idx = x_idx + offsets[None, :]                                    # (B, F)
    lin = jnp.take(wlin[:, 0], idx, axis=0).sum(axis=1) + bias[0, 0]
    xs = emb_tables[:, idx, :]                                        # (F_tables, B, F, D)
    F = x_idx.shape[1]
    ffm = jnp.zeros((x_idx.shape[0],), jnp.float32)
    for i in range(F - 1):
        for j in range(i + 1, F):
            ffm = ffm + jnp.sum(xs[j, :, i, :] * xs[i, :, j, :], axis=-1)
    return jax.nn.sigmoid(lin + ffm)


if __name__ == "__main__":
    # Small, deterministic configuration.
    field_dims = (3, 5, 7, 11)          # F = 4 fields, V = 26 total features
    embed_dim = 16                      # output_dim of FieldAwareFactorization
    batch = 256                         # -> 2 batch tiles of 128 (both v7x TensorCores busy)

    F = len(field_dims)
    V = int(np.sum(field_dims))
    offsets = jnp.asarray(np.concatenate([[0], np.cumsum(field_dims)[:-1]]), dtype=jnp.int32)

    key = jax.random.PRNGKey(0)
    k_x, k_w, k_e = jax.random.split(key, 3)

    # Input: one categorical index per field, in [0, field_dims[f]).
    x_idx = jax.random.randint(
        k_x, (batch, F), minval=0, maxval=jnp.asarray(field_dims, dtype=jnp.int32)[None, :]
    ).astype(jnp.int32)

    # Parameters (deterministic init; FeaturesLinear bias is zeros as in the module __init__).
    wlin = jax.random.normal(k_w, (V, 1), dtype=jnp.float32) * 0.1
    bias = jnp.zeros((1, 1), dtype=jnp.float32)
    emb_tables = jax.random.normal(k_e, (F, V, embed_dim), dtype=jnp.float32) * 0.1

    y = jax.block_until_ready(ffm_forward(x_idx, wlin, bias, emb_tables, field_dims))
    y_ref = jax.block_until_ready(ffm_reference(x_idx, wlin, bias, emb_tables, offsets))

    # Embedding tables go through the MXU in bf16 (f32 accumulation); the linear term stays f32,
    # so the tolerance is tighter than the previous all-bf16 packing.
    np.testing.assert_allclose(np.asarray(y), np.asarray(y_ref), rtol=1e-2, atol=3e-3)

    print("KERNEL_OK")
</pallas_src>

<mosaic_0001>
module attributes {stable_mosaic.version = 11 : i64} {
  func.func @ffm_kernel(%arg0: i32, %arg1: memref<128x4xi32, #tpu.memory_space<vmem>>, %arg2: memref<26x256xbf16, #tpu.memory_space<vmem>>, %arg3: memref<1x26xf32, #tpu.memory_space<vmem>>, %arg4: memref<1xf32, #tpu.memory_space<smem>>, %arg5: memref<1x128xf32, #tpu.memory_space<vmem>>) attributes {dimension_semantics = [#tpu.dimension_semantics<parallel>], iteration_bounds = array<i64: 2>, scalar_prefetch = 0 : i64, scratch_operands = 0 : i64, tpu.core_type = #tpu.core_type<tc>, window_params = [{transform_indices = @transform_0, window_bounds = array<i64: 128, 4>}, {pipeline_mode = #tpu.pipeline_mode<synchronous>, transform_indices = @transform_1, window_bounds = array<i64: 26, 256>}, {pipeline_mode = #tpu.pipeline_mode<synchronous>, transform_indices = @transform_2, window_bounds = array<i64: 1, 26>}, {transform_indices = @transform_3, window_bounds = array<i64: 1>}, {transform_indices = @transform_4, window_bounds = array<i64: 1, 128>}]} {
    %c0 = arith.constant 0 : index
    %c0_0 = arith.constant 0 : index
    %0 = vector.load %arg1[%c0, %c0_0] : memref<128x4xi32, #tpu.memory_space<vmem>>, vector<128x4xi32>
    %1 = tpu.iota {dimensions = array<i32: 1>} : vector<128x26xi32>
    %cst = arith.constant 0.000000e+00 : f32
    %2 = vector.broadcast %cst : f32 to vector<128x26xf32>
    %3 = vector.extract_strided_slice %0 {offsets = [0, 0], sizes = [128, 1], strides = [1, 1]} : vector<128x4xi32> to vector<128x1xi32>
    %4 = vector.broadcast %3 : vector<128x1xi32> to vector<128x26xi32>
    %5 = arith.cmpi eq, %4, %1 : vector<128x26xi32>
    %6 = arith.extui %5 : vector<128x26xi1> to vector<128x26xi32>
    %7 = arith.sitofp %6 : vector<128x26xi32> to vector<128x26xf32>
    %8 = arith.addf %2, %7 : vector<128x26xf32>
    %9 = vector.extract_strided_slice %0 {offsets = [0, 1], sizes = [128, 1], strides = [1, 1]} : vector<128x4xi32> to vector<128x1xi32>
    %10 = vector.broadcast %9 : vector<128x1xi32> to vector<128x26xi32>
    %11 = arith.cmpi eq, %10, %1 : vector<128x26xi32>
    %12 = arith.extui %11 : vector<128x26xi1> to vector<128x26xi32>
    %13 = arith.sitofp %12 : vector<128x26xi32> to vector<128x26xf32>
    %14 = arith.addf %8, %13 : vector<128x26xf32>
    %15 = vector.extract_strided_slice %0 {offsets = [0, 2], sizes = [128, 1], strides = [1, 1]} : vector<128x4xi32> to vector<128x1xi32>
    %16 = vector.broadcast %15 : vector<128x1xi32> to vector<128x26xi32>
    %17 = arith.cmpi eq, %16, %1 : vector<128x26xi32>
    %18 = arith.extui %17 : vector<128x26xi1> to vector<128x26xi32>
    %19 = arith.sitofp %18 : vector<128x26xi32> to vector<128x26xf32>
    %20 = arith.addf %14, %19 : vector<128x26xf32>
    %21 = vector.extract_strided_slice %0 {offsets = [0, 3], sizes = [128, 1], strides = [1, 1]} : vector<128x4xi32> to vector<128x1xi32>
    %22 = vector.broadcast %21 : vector<128x1xi32> to vector<128x26xi32>
    %23 = arith.cmpi eq, %22, %1 : vector<128x26xi32>
    %24 = arith.extui %23 : vector<128x26xi1> to vector<128x26xi32>
    %25 = arith.sitofp %24 : vector<128x26xi32> to vector<128x26xf32>
    %26 = arith.addf %20, %25 : vector<128x26xf32>
    %27 = arith.truncf %26 : vector<128x26xf32> to vector<128x26xbf16>
    %c0_1 = arith.constant 0 : index
    %c0_2 = arith.constant 0 : index
    %28 = vector.load %arg2[%c0_1, %c0_2] : memref<26x256xbf16, #tpu.memory_space<vmem>>, vector<26x256xbf16>
    %cst_3 = arith.constant dense<0.000000e+00> : vector<128x256xf32>
    %29 = tpu.matmul %27, %28, %cst_3 {dimension_numbers = #tpu.dot_dimension_numbers<[1], [0], [0], [1], [0, 0, 1, 1], [], []>} : vector<128x26xbf16>, vector<26x256xbf16>, vector<128x256xf32> -> vector<128x256xf32>
    %30 = vector.extract_strided_slice %29 {offsets = [0, 0], sizes = [128, 128], strides = [1, 1]} : vector<128x256xf32> to vector<128x128xf32>
    %31 = vector.extract_strided_slice %29 {offsets = [0, 128], sizes = [128, 128], strides = [1, 1]} : vector<128x256xf32> to vector<128x128xf32>
    %32 = arith.mulf %30, %31 : vector<128x128xf32>
    %cst_4 = arith.constant dense<0.000000e+00> : vector<128xf32>
    %33 = vector.multi_reduction <add>, %32, %cst_4 [1] : vector<128x128xf32> to vector<128xf32>
    %c0_5 = arith.constant 0 : index
    %c0_6 = arith.constant 0 : index
    %34 = vector.load %arg3[%c0_5, %c0_6] : memref<1x26xf32, #tpu.memory_space<vmem>>, vector<1x26xf32>
    %35 = vector.broadcast %34 : vector<1x26xf32> to vector<128x26xf32>
    %36 = arith.mulf %26, %35 : vector<128x26xf32>
    %cst_7 = arith.constant dense<0.000000e+00> : vector<128xf32>
    %37 = vector.multi_reduction <add>, %36, %cst_7 [1] : vector<128x26xf32> to vector<128xf32>
    %38 = arith.addf %33, %37 : vector<128xf32>
    %c0_8 = arith.constant 0 : index
    %39 = memref.load %arg4[%c0_8] : memref<1xf32, #tpu.memory_space<smem>>
    %40 = vector.broadcast %39 : f32 to vector<128xf32>
    %41 = arith.addf %38, %40 : vector<128xf32>
    %42 = arith.negf %41 : vector<128xf32>
    %43 = math.exp %42 : vector<128xf32>
    %cst_9 = arith.constant 1.000000e+00 : f32
    %44 = vector.broadcast %cst_9 : f32 to vector<128xf32>
    %45 = arith.addf %44, %43 : vector<128xf32>
    %46 = arith.divf %44, %45 : vector<128xf32>
    %c0_10 = arith.constant 0 : index
    %c0_11 = arith.constant 0 : index
    %47 = vector.load %arg5[%c0_10, %c0_11] : memref<1x128xf32, #tpu.memory_space<vmem>>, vector<1x128xf32>
    %48 = vector.shape_cast %47 : vector<1x128xf32> to vector<128xf32>
    %49 = vector.shape_cast %46 : vector<128xf32> to vector<1x128xf32>
    tpu.vector_store %arg5[%c0_10, %c0_11], %49 {strides = array<i32>} : memref<1x128xf32, #tpu.memory_space<vmem>>, vector<1x128xf32>,
    return
  }
  func.func @transform_0(%arg0: i32) -> (i32, i32) {
    %c0_i32 = arith.constant 0 : i32
    %c0_i32_0 = arith.constant 0 : i32
    return %arg0, %c0_i32 : i32, i32
  }
  func.func @transform_1(%arg0: i32) -> (i32, i32) {
    %c0_i32 = arith.constant 0 : i32
    %c0_i32_0 = arith.constant 0 : i32
    %c0_i32_1 = arith.constant 0 : i32
    return %c0_i32, %c0_i32_0 : i32, i32
  }
  func.func @transform_2(%arg0: i32) -> (i32, i32) {
    %c0_i32 = arith.constant 0 : i32
    %c0_i32_0 = arith.constant 0 : i32
    %c0_i32_1 = arith.constant 0 : i32
    return %c0_i32, %c0_i32_0 : i32, i32
  }
  func.func @transform_3(%arg0: i32) -> i32 {
    %c0_i32 = arith.constant 0 : i32
    %c0_i32_0 = arith.constant 0 : i32
    return %c0_i32 : i32
  }
  func.func @transform_4(%arg0: i32) -> (i32, i32) {
    %c0_i32 = arith.constant 0 : i32
    %c0_i32_0 = arith.constant 0 : i32
    return %c0_i32, %arg0 : i32, i32
  }
}

</mosaic_0001>

<llo_original>
// kernel: tpu_custom_call.1
$region0: #{tpu_custom_call.1}
  #allocation0 [shape = 'u32[]', space=smem, size = 0x4, offset = 0x4, fixed_abs, tag = 'smem constant byte address 0x4 - core index']
  #allocation1 [shape = 'u32[72,128]{1,0:T(1,128)}', space=vmem, size = 0x9000, scoped, tag = 'internal scratch']
  #allocation2 [shape = 'f32[1]{0:T(128)S(6)}', space=smem, size = 0x200, scoped, tag = 'scoped memory for tpu_custom_call.1']
  %s0 = inlined_call_operand.vmem [shape: s32[256,4], index: 0, kind: input, shape index: {}]
  %s1 = inlined_call_operand.vmem [shape: bf16[26,256], index: 1, kind: input, shape index: {}]
  %s2 = inlined_call_operand.vmem [shape: f32[1,26], index: 2, kind: input, shape index: {}]
  %s3 = inlined_call_operand.<no memory space> [shape: f32[1], index: 3, kind: input, shape index: {}]
  %s4 = inlined_call_operand.hbm [shape: f32[1,256], index: 4, kind: output, shape index: {}]
  %s5 = sld [smem:[#allocation0]]
  $region49: #{tpu_custom_call.1} parent=0
    _
  %s7 = ssub.s32 1, %s5
  %s8 = scalar_select 0, %s7, %s5
  %9 = sst [smem:[#allocation2]] %s3
  $region1: #{tpu_custom_call.1} parent=0
    #allocation3 [shape = 'u8[1024]{0}', space=vmem, size = 0x400, scoped, tag = 'output window, operand 0']
    #allocation4 [shape = 's32[2]{0}', space=sflag, size = 0x8, scoped, tag = 'scoped memory for tpu_custom_call.1']
    %10 = vsyncpa [#allocation4], 0
    %s11 = scalar_lea.sflag [#allocation4], 1
    %12 = vsyncpa %s11, 0
    loop: start=0, step=1, limit=4
    $region2: #{tpu_custom_call.1} parent=1 // loop_pre_header
      _
    $region3: #{tpu_custom_call.1} parent=1 // loop_header
      %s14 = sphi 0, %s18
      %p15 = scmp.ge.s32.totalorder %s14, 4
      %s24 = sphi 0, %s26
      %s27 = sphi 0, %s24
      %s28 = sphi 0, %s27
      %s44 = sphi 0, %s28
      %s48 = sphi 0, %s48
      %s50 = sphi 0, %s48
      %s51 = sphi 0, %s50
      %s65 = sphi 0, %s51
      %s69 = sphi 0, %s69
      %s71 = sphi 0, %s69
      %s72 = sphi 0, %s71
      %s86 = sphi 0, %s72
      %s90 = sphi 0, %s90
      %s92 = sphi 0, %s90
      %s93 = sphi 0, %s92
      %s107 = sphi 0, %s93
      %s113 = sphi 0, %s115
      %s116 = sphi 0, %s113
      %s117 = sphi 0, %s116
      %s133 = sphi 0, %s117
    $region4: #{tpu_custom_call.1} parent=1 // loop_header_branch
      %17 = sbr.rel (%p15) target = $region8
    $region5: #{tpu_custom_call.1} parent=1 // loop_body
      %s19 = ssub.s32 %s14, 1
      %s20 = ssub.s32 %s14, 2
      %s21 = sadd.s32 %s14, 1
      %s22 = ssub.s32 %s14, %s21
      %p23 = scmp.eq.s32.totalorder %s22, 0
      %s25 = sadd.s32 %s24, 1
      %s26 = scalar_select %p23, %s24, %s25
      %p29 = pneg %p23
      %p30 = scmp.eq.s32.totalorder %s14, 1
      %p31 = por %p29, %p30
      %p32 = scmp.ne.s32.totalorder %s24, %s27
      %p33 = scmp.eq.s32.totalorder %s14, 0
      %p34 = por %p32, %p33
      %p35 = scmp.ne.s32.totalorder %s24, %s27
      %p36 = scmp.eq.s32.totalorder %s19, 1
      %p37 = por %p35, %p36
      %p38 = scmp.ne.s32.totalorder %s27, %s28
      %p39 = scmp.eq.s32.totalorder %s19, 0
      %p40 = por %p38, %p39
      %p41 = scmp.ne.s32.totalorder %s27, %s28
      %p42 = scmp.eq.s32.totalorder %s20, 1
      %p43 = por %p41, %p42
      %p45 = scmp.ne.s32.totalorder %s28, %s44
      %p46 = scmp.eq.s32.totalorder %s20, 0
      %p47 = por %p45, %p46
      %s49 = sadd.s32 %s48, 1
      %p52 = scmp.eq.s32.totalorder %s14, 1
      %p53 = scmp.ne.s32.totalorder %s48, %s50
      %p54 = scmp.eq.s32.totalorder %s14, 0
      %p55 = por %p53, %p54
      %p56 = scmp.ne.s32.totalorder %s48, %s50
      %p57 = scmp.eq.s32.totalorder %s19, 1
      %p58 = por %p56, %p57
      %p59 = scmp.ne.s32.totalorder %s50, %s51
      %p60 = scmp.eq.s32.totalorder %s19, 0
      %p61 = por %p59, %p60
      %p62 = scmp.ne.s32.totalorder %s50, %s51
      %p63 = scmp.eq.s32.totalorder %s20, 1
      %p64 = por %p62, %p63
      %p66 = scmp.ne.s32.totalorder %s51, %s65
      %p67 = scmp.eq.s32.totalorder %s20, 0
      %p68 = por %p66, %p67
      %s70 = sadd.s32 %s69, 1
      %p73 = scmp.eq.s32.totalorder %s14, 1
      %p74 = scmp.ne.s32.totalorder %s69, %s71
      %p75 = scmp.eq.s32.totalorder %s14, 0
      %p76 = por %p74, %p75
      %p77 = scmp.ne.s32.totalorder %s69, %s71
      %p78 = scmp.eq.s32.totalorder %s19, 1
      %p79 = por %p77, %p78
      %p80 = scmp.ne.s32.totalorder %s71, %s72
      %p81 = scmp.eq.s32.totalorder %s19, 0
      %p82 = por %p80, %p81
      %p83 = scmp.ne.s32.totalorder %s71, %s72
      %p84 = scmp.eq.s32.totalorder %s20, 1
      %p85 = por %p83, %p84
      %p87 = scmp.ne.s32.totalorder %s72, %s86
      %p88 = scmp.eq.s32.totalorder %s20, 0
      %p89 = por %p87, %p88
      %s91 = sadd.s32 %s90, 1
      %p94 = scmp.eq.s32.totalorder %s14, 1
      %p95 = scmp.ne.s32.totalorder %s90, %s92
      %p96 = scmp.eq.s32.totalorder %s14, 0
      %p97 = por %p95, %p96
      %p98 = scmp.ne.s32.totalorder %s90, %s92
      %p99 = scmp.eq.s32.totalorder %s19, 1
      %p100 = por %p98, %p99
      %p101 = scmp.ne.s32.totalorder %s92, %s93
      %p102 = scmp.eq.s32.totalorder %s19, 0
      %p103 = por %p101, %p102
      %p104 = scmp.ne.s32.totalorder %s92, %s93
      %p105 = scmp.eq.s32.totalorder %s20, 1
      %p106 = por %p104, %p105
      %p108 = scmp.ne.s32.totalorder %s93, %s107
      %p109 = scmp.eq.s32.totalorder %s20, 0
      %p110 = por %p108, %p109
      %s111 = ssub.s32 %s14, %s21
      %p112 = scmp.eq.s32.totalorder %s111, 0
      %s114 = sadd.s32 %s113, 1
      %s115 = scalar_select %p112, %s113, %s114
      %p118 = pneg %p112
      %p119 = scmp.eq.s32.totalorder %s14, 1
      %p120 = por %p118, %p119
      %p121 = scmp.ne.s32.totalorder %s113, %s116
      %p122 = scmp.eq.s32.totalorder %s14, 0
      %p123 = por %p121, %p122
      %p124 = scmp.ne.s32.totalorder %s113, %s116
      %p125 = scmp.eq.s32.totalorder %s19, 1
      %p126 = por %p124, %p125
      %p127 = scmp.ne.s32.totalorder %s116, %s117
      %p128 = scmp.eq.s32.totalorder %s19, 0
      %p129 = por %p127, %p128
      %p130 = scmp.ne.s32.totalorder %s116, %s117
      %p131 = scmp.eq.s32.totalorder %s20, 1
      %p132 = por %p130, %p131
      %p134 = scmp.ne.s32.totalorder %s117, %s133
      %p135 = scmp.eq.s32.totalorder %s20, 0
      %p136 = por %p134, %p135
      %p137 = scmp.le.s32.totalorder 1, %s14
      %p138 = scmp.lt.s32.totalorder %s14, 3
      %p139 = pnand %p137, %p138
      %p140 = pneg %p139
      // Predicated region
      $region9: #{tpu_custom_call.1} parent=5 // pred_check
        _
      $region10: #{tpu_custom_call.1} parent=5 // pred_check_branch
        %142 = sbr.rel (%p139) target = $region12
      $region11: #{tpu_custom_call.1} parent=5 // pred_region
        %s143 = ssub.s32 %s14, 1
        // Predicated region
        $region13: #{tpu_custom_call.1} parent=11 // pred_check
          %p144 = pneg %p61
        $region14: #{tpu_custom_call.1} parent=11 // pred_check_branch
          %146 = sbr.rel (%p144) target = $region16
        $region15: #{tpu_custom_call.1} parent=11 // pred_region
          _
        $region16: #{tpu_custom_call.1} parent=11 // pred_fallthru
          _
        // Predicated region
        $region17: #{tpu_custom_call.1} parent=11 // pred_check
          %p147 = pneg %p82
        $region18: #{tpu_custom_call.1} parent=11 // pred_check_branch
          %149 = sbr.rel (%p147) target = $region20
        $region19: #{tpu_custom_call.1} parent=11 // pred_region
          _
        $region20: #{tpu_custom_call.1} parent=11 // pred_fallthru
          _
        // Predicated region
        $region21: #{tpu_custom_call.1} parent=11 // pred_check
          %p150 = pneg %p103
        $region22: #{tpu_custom_call.1} parent=11 // pred_check_branch
          %152 = sbr.rel (%p150) target = $region24
        $region23: #{tpu_custom_call.1} parent=11 // pred_region
          _
        $region24: #{tpu_custom_call.1} parent=11 // pred_fallthru
          _
      $region12: #{tpu_custom_call.1} parent=5 // pred_fallthru
        _
      %p153 = scmp.lt.s32.totalorder %s14, 2
      // Predicated region
      $region25: #{tpu_custom_call.1} parent=5 // pred_check
        %p154 = pneg %p153
      $region26: #{tpu_custom_call.1} parent=5 // pred_check_branch
        %156 = sbr.rel (%p154) target = $region28
      $region27: #{tpu_custom_call.1} parent=5 // pred_region
        // Predicated region
        $region29: #{tpu_custom_call.1} parent=27 // pred_check
          %p157 = pneg %p34
        $region30: #{tpu_custom_call.1} parent=27 // pred_check_branch
          %159 = sbr.rel (%p157) target = $region32
        $region31: #{tpu_custom_call.1} parent=27 // pred_region
          %s160 = smul.u32 16, %s14
          %p161 = scmp.lt.s32.totalorder %s160, 31
          %s162 = scalar_select %p161, %s160, 31
          %s163 = smul.addr %s162, 8
          %s164 = scalar_lea.vmem %s0, %s163
          %s165 = smul.u32 16, %s14
        $region32: #{tpu_custom_call.1} parent=27 // pred_fallthru
          _
      $region28: #{tpu_custom_call.1} parent=5 // pred_fallthru
        _
      %p166 = scmp.le.s32.totalorder 1, %s14
      %p167 = scmp.lt.s32.totalorder %s14, 3
      %p168 = pnand %p166, %p167
      %p169 = pneg %p168
      // Predicated region
      $region33: #{tpu_custom_call.1} parent=5 // pred_check
        _
      $region34: #{tpu_custom_call.1} parent=5 // pred_check_branch
        %171 = sbr.rel (%p168) target = $region36
      $region35: #{tpu_custom_call.1} parent=5 // pred_region
        %s172 = ssub.s32 %s14, 1
        %s173 = smul.u32 16, %s19
        %p174 = scmp.lt.s32.totalorder %s173, 31
        %s175 = scalar_select %p174, %s173, 31
        %s176 = smul.addr %s175, 8
        %s177 = scalar_lea.vmem %s0, %s176
        %p178 = pneg %p40
        %p179 = pneg %p37
        %p180 = pneg %p61
        %p181 = pneg %p58
        %p182 = pneg %p82
        %p183 = pneg %p79
        %p184 = pneg %p103
        %p185 = pneg %p100
        %p186 = pneg %p129
        %p187 = pneg %p126
        %s188 = sand.u32 %s116, 1
        %s189 = scalar_lea.sflag [#allocation4], %s188
        %s190 = sand.u32 %s116, 1
        %s191 = scalar_lea.vmem [#allocation3], %s190
        %s192 = smul.u32 16, %s19
        %p193 = scmp.lt.s32.totalorder %s192, 31
        %s194 = scalar_select %p193, %s192, 31
        %s195 = smul.addr %s194, 8
        %s196 = scalar_lea.vmem %s0, %s195
        %s197 = smul.u32 16, %s19
        %v199 = vld [vmem:[%s196] sm:$0xff]
        %v200 = vld [vmem:[%s196 + $0x8] sm:$0xff]
        %v201 = vld [vmem:[%s196 + $0x10] sm:$0xff]
        %v202 = vld [vmem:[%s196 + $0x18] sm:$0xff]
        %v203 = vld [vmem:[%s196 + $0x20] sm:$0xff]
        %v204 = vld [vmem:[%s196 + $0x28] sm:$0xff]
        %v205 = vld [vmem:[%s196 + $0x30] sm:$0xff]
        %v206 = vld [vmem:[%s196 + $0x38] sm:$0xff]
        %v207 = vld [vmem:[%s196 + $0x40] sm:$0xff]
        %v208 = vld [vmem:[%s196 + $0x48] sm:$0xff]
        %v209 = vld [vmem:[%s196 + $0x50] sm:$0xff]
        %v210 = vld [vmem:[%s196 + $0x58] sm:$0xff]
        %v211 = vld [vmem:[%s196 + $0x60] sm:$0xff]
        %v212 = vld [vmem:[%s196 + $0x68] sm:$0xff]
        %v213 = vld [vmem:[%s196 + $0x70] sm:$0xff]
        %v214 = vld [vmem:[%s196 + $0x78] sm:$0xff]
        %v215 = vlaneseq
        %v216 = vand.u32 %v215, 127
        %217 = vset.pattern.permute.xlu0 0
        %218 = vperm.xlu0 %217, %v199
        %v219 = vpop.permute.xlu0 %218
        %220 = vset.pattern.permute.xlu0 0
        %221 = vperm.xlu0 %220, %v200
        %v222 = vpop.permute.xlu0 %221
        %223 = vset.pattern.permute.xlu0 0
        %224 = vperm.xlu0 %223, %v201
        %v225 = vpop.permute.xlu0 %224
        %226 = vset.pattern.permute.xlu0 0
        %227 = vperm.xlu0 %226, %v202
        %v228 = vpop.permute.xlu0 %227
        %229 = vset.pattern.permute.xlu0 0
        %230 = vperm.xlu0 %229, %v203
        %v231 = vpop.permute.xlu0 %230
        %232 = vset.pattern.permute.xlu0 0
        %233 = vperm.xlu0 %232, %v204
        %v234 = vpop.permute.xlu0 %233
        %235 = vset.pattern.permute.xlu0 0
        %236 = vperm.xlu0 %235, %v205
        %v237 = vpop.permute.xlu0 %236
        %238 = vset.pattern.permute.xlu0 0
        %239 = vperm.xlu0 %238, %v206
        %v240 = vpop.permute.xlu0 %239
        %241 = vset.pattern.permute.xlu0 0
        %242 = vperm.xlu0 %241, %v207
        %v243 = vpop.permute.xlu0 %242
        %244 = vset.pattern.permute.xlu0 0
        %245 = vperm.xlu0 %244, %v208
        %v246 = vpop.permute.xlu0 %245
        %247 = vset.pattern.permute.xlu0 0
        %248 = vperm.xlu0 %247, %v209
        %v249 = vpop.permute.xlu0 %248
        %250 = vset.pattern.permute.xlu0 0
        %251 = vperm.xlu0 %250, %v210
        %v252 = vpop.permute.xlu0 %251
        %253 = vset.pattern.permute.xlu0 0
        %254 = vperm.xlu0 %253, %v211
        %v255 = vpop.permute.xlu0 %254
        %256 = vset.pattern.permute.xlu0 0
        %257 = vperm.xlu0 %256, %v212
        %v258 = vpop.permute.xlu0 %257
        %259 = vset.pattern.permute.xlu0 0
        %260 = vperm.xlu0 %259, %v213
        %v261 = vpop.permute.xlu0 %260
        %262 = vset.pattern.permute.xlu0 0
        %263 = vperm.xlu0 %262, %v214
        %v264 = vpop.permute.xlu0 %263
        %vm265 = vcmp.eq.s32.totalorder %v219, %v216
        %vm266 = vcmp.eq.s32.totalorder %v222, %v216
        %vm267 = vcmp.eq.s32.totalorder %v225, %v216
        %vm268 = vcmp.eq.s32.totalorder %v228, %v216
        %vm269 = vcmp.eq.s32.totalorder %v231, %v216
        %vm270 = vcmp.eq.s32.totalorder %v234, %v216
        %vm271 = vcmp.eq.s32.totalorder %v237, %v216
        %vm272 = vcmp.eq.s32.totalorder %v240, %v216
        %vm273 = vcmp.eq.s32.totalorder %v243, %v216
        %vm274 = vcmp.eq.s32.totalorder %v246, %v216
        %vm275 = vcmp.eq.s32.totalorder %v249, %v216
        %vm276 = vcmp.eq.s32.totalorder %v252, %v216
        %vm277 = vcmp.eq.s32.totalorder %v255, %v216
        %vm278 = vcmp.eq.s32.totalorder %v258, %v216
        %vm279 = vcmp.eq.s32.totalorder %v261, %v216
        %vm280 = vcmp.eq.s32.totalorder %v264, %v216
        %v281 = vsel %vm265, 1, 0
        %v282 = vsel %vm266, 1, 0
        %v283 = vsel %vm267, 1, 0
        %v284 = vsel %vm268, 1, 0
        %v285 = vsel %vm269, 1, 0
        %v286 = vsel %vm270, 1, 0
        %v287 = vsel %vm271, 1, 0
        %v288 = vsel %vm272, 1, 0
        %v289 = vsel %vm273, 1, 0
        %v290 = vsel %vm274, 1, 0
        %v291 = vsel %vm275, 1, 0
        %v292 = vsel %vm276, 1, 0
        %v293 = vsel %vm277, 1, 0
        %v294 = vsel %vm278, 1, 0
        %v295 = vsel %vm279, 1, 0
        %v296 = vsel %vm280, 1, 0
        %v297 = vcvt.s32.f32 %v281
        %v298 = vcvt.s32.f32 %v282
        %v299 = vcvt.s32.f32 %v283
        %v300 = vcvt.s32.f32 %v284
        %v301 = vcvt.s32.f32 %v285
        %v302 = vcvt.s32.f32 %v286
        %v303 = vcvt.s32.f32 %v287
        %v304 = vcvt.s32.f32 %v288
        %v305 = vcvt.s32.f32 %v289
        %v306 = vcvt.s32.f32 %v290
        %v307 = vcvt.s32.f32 %v291
        %v308 = vcvt.s32.f32 %v292
        %v309 = vcvt.s32.f32 %v293
        %v310 = vcvt.s32.f32 %v294
        %v311 = vcvt.s32.f32 %v295
        %v312 = vcvt.s32.f32 %v296
        %v313 = vadd.f32 %v297, 0.0
        %v314 = vadd.f32 %v298, 0.0
        %v315 = vadd.f32 %v299, 0.0
        %v316 = vadd.f32 %v300, 0.0
        %v317 = vadd.f32 %v301, 0.0
        %v318 = vadd.f32 %v302, 0.0
        %v319 = vadd.f32 %v303, 0.0
        %v320 = vadd.f32 %v304, 0.0
        %v321 = vadd.f32 %v305, 0.0
        %v322 = vadd.f32 %v306, 0.0
        %v323 = vadd.f32 %v307, 0.0
        %v324 = vadd.f32 %v308, 0.0
        %v325 = vadd.f32 %v309, 0.0
        %v326 = vadd.f32 %v310, 0.0
        %v327 = vadd.f32 %v311, 0.0
        %v328 = vadd.f32 %v312, 0.0
        %329 = vset.pattern.permute.xlu0 1
        %330 = vperm.xlu0 %329, %v199
        %v331 = vpop.permute.xlu0 %330
        %332 = vset.pattern.permute.xlu0 1
        %333 = vperm.xlu0 %332, %v200
        %v334 = vpop.permute.xlu0 %333
        %335 = vset.pattern.permute.xlu0 1
        %336 = vperm.xlu0 %335, %v201
        %v337 = vpop.permute.xlu0 %336
        %338 = vset.pattern.permute.xlu0 1
        %339 = vperm.xlu0 %338, %v202
        %v340 = vpop.permute.xlu0 %339
        %341 = vset.pattern.permute.xlu0 1
        %342 = vperm.xlu0 %341, %v203
        %v343 = vpop.permute.xlu0 %342
        %344 = vset.pattern.permute.xlu0 1
        %345 = vperm.xlu0 %344, %v204
        %v346 = vpop.permute.xlu0 %345
        %347 = vset.pattern.permute.xlu0 1
        %348 = vperm.xlu0 %347, %v205
        %v349 = vpop.permute.xlu0 %348
        %350 = vset.pattern.permute.xlu0 1
        %351 = vperm.xlu0 %350, %v206
        %v352 = vpop.permute.xlu0 %351
        %353 = vset.pattern.permute.xlu0 1
        %354 = vperm.xlu0 %353, %v207
        %v355 = vpop.permute.xlu0 %354
        %356 = vset.pattern.permute.xlu0 1
        %357 = vperm.xlu0 %356, %v208
        %v358 = vpop.permute.xlu0 %357
        %359 = vset.pattern.permute.xlu0 1
        %360 = vperm.xlu0 %359, %v209
        %v361 = vpop.permute.xlu0 %360
        %362 = vset.pattern.permute.xlu0 1
        %363 = vperm.xlu0 %362, %v210
        %v364 = vpop.permute.xlu0 %363
        %365 = vset.pattern.permute.xlu0 1
        %366 = vperm.xlu0 %365, %v211
        %v367 = vpop.permute.xlu0 %366
        %368 = vset.pattern.permute.xlu0 1
        %369 = vperm.xlu0 %368, %v212
        %v370 = vpop.permute.xlu0 %369
        %371 = vset.pattern.permute.xlu0 1
        %372 = vperm.xlu0 %371, %v213
        %v373 = vpop.permute.xlu0 %372
        %374 = vset.pattern.permute.xlu0 1
        %375 = vperm.xlu0 %374, %v214
        %v376 = vpop.permute.xlu0 %375
        %vm377 = vcmp.eq.s32.totalorder %v331, %v216
        %vm378 = vcmp.eq.s32.totalorder %v334, %v216
        %vm379 = vcmp.eq.s32.totalorder %v337, %v216
        %vm380 = vcmp.eq.s32.totalorder %v340, %v216
        %vm381 = vcmp.eq.s32.totalorder %v343, %v216
        %vm382 = vcmp.eq.s32.totalorder %v346, %v216
        %vm383 = vcmp.eq.s32.totalorder %v349, %v216
        %vm384 = vcmp.eq.s32.totalorder %v352, %v216
        %vm385 = vcmp.eq.s32.totalorder %v355, %v216
        %vm386 = vcmp.eq.s32.totalorder %v358, %v216
        %vm387 = vcmp.eq.s32.totalorder %v361, %v216
        %vm388 = vcmp.eq.s32.totalorder %v364, %v216
        %vm389 = vcmp.eq.s32.totalorder %v367, %v216
        %vm390 = vcmp.eq.s32.totalorder %v370, %v216
        %vm391 = vcmp.eq.s32.totalorder %v373, %v216
        %vm392 = vcmp.eq.s32.totalorder %v376, %v216
        %v393 = vsel %vm377, 1, 0
        %v394 = vsel %vm378, 1, 0
        %v395 = vsel %vm379, 1, 0
        %v396 = vsel %vm380, 1, 0
        %v397 = vsel %vm381, 1, 0
        %v398 = vsel %vm382, 1, 0
        %v399 = vsel %vm383, 1, 0
        %v400 = vsel %vm384, 1, 0
        %v401 = vsel %vm385, 1, 0
        %v402 = vsel %vm386, 1, 0
        %v403 = vsel %vm387, 1, 0
        %v404 = vsel %vm388, 1, 0
        %v405 = vsel %vm389, 1, 0
        %v406 = vsel %vm390, 1, 0
        %v407 = vsel %vm391, 1, 0
        %v408 = vsel %vm392, 1, 0
        %v409 = vcvt.s32.f32 %v393
        %v410 = vcvt.s32.f32 %v394
        %v411 = vcvt.s32.f32 %v395
        %v412 = vcvt.s32.f32 %v396
        %v413 = vcvt.s32.f32 %v397
        %v414 = vcvt.s32.f32 %v398
        %v415 = vcvt.s32.f32 %v399
        %v416 = vcvt.s32.f32 %v400
        %v417 = vcvt.s32.f32 %v401
        %v418 = vcvt.s32.f32 %v402
        %v419 = vcvt.s32.f32 %v403
        %v420 = vcvt.s32.f32 %v404
        %v421 = vcvt.s32.f32 %v405
        %v422 = vcvt.s32.f32 %v406
        %v423 = vcvt.s32.f32 %v407
        %v424 = vcvt.s32.f32 %v408
        %v425 = vadd.f32 %v313, %v409
        %v426 = vadd.f32 %v314, %v410
        %v427 = vadd.f32 %v315, %v411
        %v428 = vadd.f32 %v316, %v412
        %v429 = vadd.f32 %v317, %v413
        %v430 = vadd.f32 %v318, %v414
        %v431 = vadd.f32 %v319, %v415
        %v432 = vadd.f32 %v320, %v416
        %v433 = vadd.f32 %v321, %v417
        %v434 = vadd.f32 %v322, %v418
        %v435 = vadd.f32 %v323, %v419
        %v436 = vadd.f32 %v324, %v420
        %v437 = vadd.f32 %v325, %v421
        %v438 = vadd.f32 %v326, %v422
        %v439 = vadd.f32 %v327, %v423
        %v440 = vadd.f32 %v328, %v424
        %441 = vset.pattern.permute.xlu0 2
        %442 = vperm.xlu0 %441, %v199
        %v443 = vpop.permute.xlu0 %442
        %444 = vset.pattern.permute.xlu0 2
        %445 = vperm.xlu0 %444, %v200
        %v446 = vpop.permute.xlu0 %445
        %447 = vset.pattern.permute.xlu0 2
        %448 = vperm.xlu0 %447, %v201
        %v449 = vpop.permute.xlu0 %448
        %450 = vset.pattern.permute.xlu0 2
        %451 = vperm.xlu0 %450, %v202
        %v452 = vpop.permute.xlu0 %451
        %453 = vset.pattern.permute.xlu0 2
        %454 = vperm.xlu0 %453, %v203
        %v455 = vpop.permute.xlu0 %454
        %456 = vset.pattern.permute.xlu0 2
        %457 = vperm.xlu0 %456, %v204
        %v458 = vpop.permute.xlu0 %457
        %459 = vset.pattern.permute.xlu0 2
        %460 = vperm.xlu0 %459, %v205
        %v461 = vpop.permute.xlu0 %460
        %462 = vset.pattern.permute.xlu0 2
        %463 = vperm.xlu0 %462, %v206
        %v464 = vpop.permute.xlu0 %463
        %465 = vset.pattern.permute.xlu0 2
        %466 = vperm.xlu0 %465, %v207
        %v467 = vpop.permute.xlu0 %466
        %468 = vset.pattern.permute.xlu0 2
        %469 = vperm.xlu0 %468, %v208
        %v470 = vpop.permute.xlu0 %469
        %471 = vset.pattern.permute.xlu0 2
        %472 = vperm.xlu0 %471, %v209
        %v473 = vpop.permute.xlu0 %472
        %474 = vset.pattern.permute.xlu0 2
        %475 = vperm.xlu0 %474, %v210
        %v476 = vpop.permute.xlu0 %475
        %477 = vset.pattern.permute.xlu0 2
        %478 = vperm.xlu0 %477, %v211
        %v479 = vpop.permute.xlu0 %478
        %480 = vset.pattern.permute.xlu0 2
        %481 = vperm.xlu0 %480, %v212
        %v482 = vpop.permute.xlu0 %481
        %483 = vset.pattern.permute.xlu0 2
        %484 = vperm.xlu0 %483, %v213
        %v485 = vpop.permute.xlu0 %484
        %486 = vset.pattern.permute.xlu0 2
        %487 = vperm.xlu0 %486, %v214
        %v488 = vpop.permute.xlu0 %487
        %vm489 = vcmp.eq.s32.totalorder %v443, %v216
        %vm490 = vcmp.eq.s32.totalorder %v446, %v216
        %vm491 = vcmp.eq.s32.totalorder %v449, %v216
        %vm492 = vcmp.eq.s32.totalorder %v452, %v216
        %vm493 = vcmp.eq.s32.totalorder %v455, %v216
        %vm494 = vcmp.eq.s32.totalorder %v458, %v216
        %vm495 = vcmp.eq.s32.totalorder %v461, %v216
        %vm496 = vcmp.eq.s32.totalorder %v464, %v216
        %vm497 = vcmp.eq.s32.totalorder %v467, %v216
        %vm498 = vcmp.eq.s32.totalorder %v470, %v216
        %vm499 = vcmp.eq.s32.totalorder %v473, %v216
        %vm500 = vcmp.eq.s32.totalorder %v476, %v216
        %vm501 = vcmp.eq.s32.totalorder %v479, %v216
        %vm502 = vcmp.eq.s32.totalorder %v482, %v216
        %vm503 = vcmp.eq.s32.totalorder %v485, %v216
        %vm504 = vcmp.eq.s32.totalorder %v488, %v216
        %v505 = vsel %vm489, 1, 0
        %v506 = vsel %vm490, 1, 0
        %v507 = vsel %vm491, 1, 0
        %v508 = vsel %vm492, 1, 0
        %v509 = vsel %vm493, 1, 0
        %v510 = vsel %vm494, 1, 0
        %v511 = vsel %vm495, 1, 0
        %v512 = vsel %vm496, 1, 0
        %v513 = vsel %vm497, 1, 0
        %v514 = vsel %vm498, 1, 0
        %v515 = vsel %vm499, 1, 0
        %v516 = vsel %vm500, 1, 0
        %v517 = vsel %vm501, 1, 0
        %v518 = vsel %vm502, 1, 0
        %v519 = vsel %vm503, 1, 0
        %v520 = vsel %vm504, 1, 0
        %v521 = vcvt.s32.f32 %v505
        %v522 = vcvt.s32.f32 %v506
        %v523 = vcvt.s32.f32 %v507
        %v524 = vcvt.s32.f32 %v508
        %v525 = vcvt.s32.f32 %v509
        %v526 = vcvt.s32.f32 %v510
        %v527 = vcvt.s32.f32 %v511
        %v528 = vcvt.s32.f32 %v512
        %v529 = vcvt.s32.f32 %v513
        %v530 = vcvt.s32.f32 %v514
        %v531 = vcvt.s32.f32 %v515
        %v532 = vcvt.s32.f32 %v516
        %v533 = vcvt.s32.f32 %v517
        %v534 = vcvt.s32.f32 %v518
        %v535 = vcvt.s32.f32 %v519
        %v536 = vcvt.s32.f32 %v520
        %v537 = vadd.f32 %v425, %v521
        %v538 = vadd.f32 %v426, %v522
        %v539 = vadd.f32 %v427, %v523
        %v540 = vadd.f32 %v428, %v524
        %v541 = vadd.f32 %v429, %v525
        %v542 = vadd.f32 %v430, %v526
        %v543 = vadd.f32 %v431, %v527
        %v544 = vadd.f32 %v432, %v528
        %v545 = vadd.f32 %v433, %v529
        %v546 = vadd.f32 %v434, %v530
        %v547 = vadd.f32 %v435, %v531
        %v548 = vadd.f32 %v436, %v532
        %v549 = vadd.f32 %v437, %v533
        %v550 = vadd.f32 %v438, %v534
        %v551 = vadd.f32 %v439, %v535
        %v552 = vadd.f32 %v440, %v536
        %553 = vset.pattern.permute.xlu0 3
        %554 = vperm.xlu0 %553, %v199
        %v555 = vpop.permute.xlu0 %554
        %556 = vset.pattern.permute.xlu0 3
        %557 = vperm.xlu0 %556, %v200
        %v558 = vpop.permute.xlu0 %557
        %559 = vset.pattern.permute.xlu0 3
        %560 = vperm.xlu0 %559, %v201
        %v561 = vpop.permute.xlu0 %560
        %562 = vset.pattern.permute.xlu0 3
        %563 = vperm.xlu0 %562, %v202
        %v564 = vpop.permute.xlu0 %563
        %565 = vset.pattern.permute.xlu0 3
        %566 = vperm.xlu0 %565, %v203
        %v567 = vpop.permute.xlu0 %566
        %568 = vset.pattern.permute.xlu0 3
        %569 = vperm.xlu0 %568, %v204
        %v570 = vpop.permute.xlu0 %569
        %571 = vset.pattern.permute.xlu0 3
        %572 = vperm.xlu0 %571, %v205
        %v573 = vpop.permute.xlu0 %572
        %574 = vset.pattern.permute.xlu0 3
        %575 = vperm.xlu0 %574, %v206
        %v576 = vpop.permute.xlu0 %575
        %577 = vset.pattern.permute.xlu0 3
        %578 = vperm.xlu0 %577, %v207
        %v579 = vpop.permute.xlu0 %578
        %580 = vset.pattern.permute.xlu0 3
        %581 = vperm.xlu0 %580, %v208
        %v582 = vpop.permute.xlu0 %581
        %583 = vset.pattern.permute.xlu0 3
        %584 = vperm.xlu0 %583, %v209
        %v585 = vpop.permute.xlu0 %584
        %586 = vset.pattern.permute.xlu0 3
        %587 = vperm.xlu0 %586, %v210
        %v588 = vpop.permute.xlu0 %587
        %589 = vset.pattern.permute.xlu0 3
        %590 = vperm.xlu0 %589, %v211
        %v591 = vpop.permute.xlu0 %590
        %592 = vset.pattern.permute.xlu0 3
        %593 = vperm.xlu0 %592, %v212
        %v594 = vpop.permute.xlu0 %593
        %595 = vset.pattern.permute.xlu0 3
        %596 = vperm.xlu0 %595, %v213
        %v597 = vpop.permute.xlu0 %596
        %598 = vset.pattern.permute.xlu0 3
        %599 = vperm.xlu0 %598, %v214
        %v600 = vpop.permute.xlu0 %599
        %vm601 = vcmp.eq.s32.totalorder %v555, %v216
        %vm602 = vcmp.eq.s32.totalorder %v558, %v216
        %vm603 = vcmp.eq.s32.totalorder %v561, %v216
        %vm604 = vcmp.eq.s32.totalorder %v564, %v216
        %vm605 = vcmp.eq.s32.totalorder %v567, %v216
        %vm606 = vcmp.eq.s32.totalorder %v570, %v216
        %vm607 = vcmp.eq.s32.totalorder %v573, %v216
        %vm608 = vcmp.eq.s32.totalorder %v576, %v216
        %vm609 = vcmp.eq.s32.totalorder %v579, %v216
        %vm610 = vcmp.eq.s32.totalorder %v582, %v216
        %vm611 = vcmp.eq.s32.totalorder %v585, %v216
        %vm612 = vcmp.eq.s32.totalorder %v588, %v216
        %vm613 = vcmp.eq.s32.totalorder %v591, %v216
        %vm614 = vcmp.eq.s32.totalorder %v594, %v216
        %vm615 = vcmp.eq.s32.totalorder %v597, %v216
        %vm616 = vcmp.eq.s32.totalorder %v600, %v216
        %v617 = vsel %vm601, 1, 0
        %v618 = vsel %vm602, 1, 0
        %v619 = vsel %vm603, 1, 0
        %v620 = vsel %vm604, 1, 0
        %v621 = vsel %vm605, 1, 0
        %v622 = vsel %vm606, 1, 0
        %v623 = vsel %vm607, 1, 0
        %v624 = vsel %vm608, 1, 0
        %v625 = vsel %vm609, 1, 0
        %v626 = vsel %vm610, 1, 0
        %v627 = vsel %vm611, 1, 0
        %v628 = vsel %vm612, 1, 0
        %v629 = vsel %vm613, 1, 0
        %v630 = vsel %vm614, 1, 0
        %v631 = vsel %vm615, 1, 0
        %v632 = vsel %vm616, 1, 0
        %v633 = vcvt.s32.f32 %v617
        %v634 = vcvt.s32.f32 %v618
        %v635 = vcvt.s32.f32 %v619
        %v636 = vcvt.s32.f32 %v620
        %v637 = vcvt.s32.f32 %v621
        %v638 = vcvt.s32.f32 %v622
        %v639 = vcvt.s32.f32 %v623
        %v640 = vcvt.s32.f32 %v624
        %v641 = vcvt.s32.f32 %v625
        %v642 = vcvt.s32.f32 %v626
        %v643 = vcvt.s32.f32 %v627
        %v644 = vcvt.s32.f32 %v628
        %v645 = vcvt.s32.f32 %v629
        %v646 = vcvt.s32.f32 %v630
        %v647 = vcvt.s32.f32 %v631
        %v648 = vcvt.s32.f32 %v632
        %v649 = vadd.f32 %v537, %v633
        %v650 = vadd.f32 %v538, %v634
        %v651 = vadd.f32 %v539, %v635
        %v652 = vadd.f32 %v540, %v636
        %v653 = vadd.f32 %v541, %v637
        %v654 = vadd.f32 %v542, %v638
        %v655 = vadd.f32 %v543, %v639
        %v656 = vadd.f32 %v544, %v640
        %v657 = vadd.f32 %v545, %v641
        %v658 = vadd.f32 %v546, %v642
        %v659 = vadd.f32 %v547, %v643
        %v660 = vadd.f32 %v548, %v644
        %v661 = vadd.f32 %v549, %v645
        %v662 = vadd.f32 %v550, %v646
        %v663 = vadd.f32 %v551, %v647
        %v664 = vadd.f32 %v552, %v648
        %v665 = vpack.c.bf16 %v650, %v649
        %v666 = vpack.c.bf16 %v652, %v651
        %v667 = vpack.c.bf16 %v654, %v653
        %v668 = vpack.c.bf16 %v656, %v655
        %v669 = vpack.c.bf16 %v658, %v657
        %v670 = vpack.c.bf16 %v660, %v659
        %v671 = vpack.c.bf16 %v662, %v661
        %v672 = vpack.c.bf16 %v664, %v663
        %v673 = vld [vmem:[%s1] sm:$0xff]
        %v674 = vld [vmem:[%s1 + $0x8] sm:$0xff]
        %v675 = vld [vmem:[%s1 + $0x10] sm:$0xff]
        %v676 = vld [vmem:[%s1 + $0x18] sm:$0x11]
        %v681 = vunpack.c.l.b16 %v673
        %v682 = vunpack.c.h.b16 %v673
        %v683 = vunpack.c.l.b16 %v674
        %v684 = vunpack.c.h.b16 %v674
        %v685 = vunpack.c.l.b16 %v675
        %v686 = vunpack.c.h.b16 %v675
        %v687 = vunpack.c.l.b16 %v676
        %v688 = vunpack.c.h.b16 %v676
        %v689 = vpack.c.b16 %v683, %v681
        %v690 = vpack.c.b16 %v684, %v682
        %v691 = vpack.c.b16 %v687, %v685
        %v692 = vpack.c.b16 %v688, %v686
        %vm695 = vcmask 211968
        %v697 = vsel %vm695, %v665, 0
        %v700 = vsel %vm695, %v666, 0
        %v703 = vsel %vm695, %v667, 0
        %v706 = vsel %vm695, %v668, 0
        %v709 = vsel %vm695, %v669, 0
        %v712 = vsel %vm695, %v670, 0
        %v715 = vsel %vm695, %v671, 0
        %v718 = vsel %vm695, %v672, 0
        %vm720 = vcmask 1044480
        %v722 = vsel %vm720, %v691, 0
        %v725 = vsel %vm720, %v692, 0
        %727 = vmatpush.bf16.msra.mxu0 0
        %728 = vmatpush.bf16.msra.mxu0 0
        %729 = vmatpush.bf16.msra.mxu0 0
        %730 = vmatpush.bf16.msra.mxu0 0
        %731 = vmatpush.bf16.msra.mxu0 0
        %732 = vmatpush.bf16.msra.mxu0 0
        %733 = vmatpush.bf16.msra.mxu0 %v722
        %734 = vmatpush.bf16.msra.mxu0 %v689
        %735 = vmatmul.bf16.gmra.mxu0 %v697
        %v736 = vpop.f32.mrf.mxu0
        %v737 = vadd.f32 0.0, %v736
        %v738 = vpop.f32.mrf.mxu0
        %v739 = vadd.f32 0.0, %v738
        %740 = vmatmul.bf16.gmra.mxu0 %v700
        %v741 = vpop.f32.mrf.mxu0
        %v742 = vadd.f32 0.0, %v741
        %v743 = vpop.f32.mrf.mxu0
        %v744 = vadd.f32 0.0, %v743
        %745 = vmatmul.bf16.gmra.mxu0 %v703
        %v746 = vpop.f32.mrf.mxu0
        %v747 = vadd.f32 0.0, %v746
        %v748 = vpop.f32.mrf.mxu0
        %v749 = vadd.f32 0.0, %v748
        %750 = vmatmul.bf16.gmra.mxu0 %v706
        %v751 = vpop.f32.mrf.mxu0
        %v752 = vadd.f32 0.0, %v751
        %v753 = vpop.f32.mrf.mxu0
        %v754 = vadd.f32 0.0, %v753
        %755 = vmatmul.bf16.gmra.mxu0 %v709
        %v756 = vpop.f32.mrf.mxu0
        %v757 = vadd.f32 0.0, %v756
        %v758 = vpop.f32.mrf.mxu0
        %v759 = vadd.f32 0.0, %v758
        %760 = vmatmul.bf16.gmra.mxu0 %v712
        %v761 = vpop.f32.mrf.mxu0
        %v762 = vadd.f32 0.0, %v761
        %v763 = vpop.f32.mrf.mxu0
        %v764 = vadd.f32 0.0, %v763
        %765 = vmatmul.bf16.gmra.mxu0 %v715
        %v766 = vpop.f32.mrf.mxu0
        %v767 = vadd.f32 0.0, %v766
        %v768 = vpop.f32.mrf.mxu0
        %v769 = vadd.f32 0.0, %v768
        %770 = vmatmul.bf16.gmra.mxu0 %v718
        %v771 = vpop.f32.mrf.mxu0
        %v772 = vadd.f32 0.0, %v771
        %v773 = vpop.f32.mrf.mxu0
        %v774 = vadd.f32 0.0, %v773
        %775 = vdwg.mxu0
        %776 = vmatpush.bf16.msra.mxu0 0
        %777 = vmatpush.bf16.msra.mxu0 0
        %778 = vmatpush.bf16.msra.mxu0 0
        %779 = vmatpush.bf16.msra.mxu0 0
        %780 = vmatpush.bf16.msra.mxu0 0
        %781 = vmatpush.bf16.msra.mxu0 0
        %782 = vmatpush.bf16.msra.mxu0 %v725
        %783 = vmatpush.bf16.msra.mxu0 %v690
        %784 = vmatmul.bf16.gmra.mxu0 %v697
        %v785 = vpop.f32.mrf.mxu0
        %v786 = vadd.f32 0.0, %v785
        %v787 = vpop.f32.mrf.mxu0
        %v788 = vadd.f32 0.0, %v787
        %789 = vmatmul.bf16.gmra.mxu0 %v700
        %v790 = vpop.f32.mrf.mxu0
        %v791 = vadd.f32 0.0, %v790
        %v792 = vpop.f32.mrf.mxu0
        %v793 = vadd.f32 0.0, %v792
        %794 = vmatmul.bf16.gmra.mxu0 %v703
        %v795 = vpop.f32.mrf.mxu0
        %v796 = vadd.f32 0.0, %v795
        %v797 = vpop.f32.mrf.mxu0
        %v798 = vadd.f32 0.0, %v797
        %799 = vmatmul.bf16.gmra.mxu0 %v706
        %v800 = vpop.f32.mrf.mxu0
        %v801 = vadd.f32 0.0, %v800
        %v802 = vpop.f32.mrf.mxu0
        %v803 = vadd.f32 0.0, %v802
        %804 = vmatmul.bf16.gmra.mxu0 %v709
        %v805 = vpop.f32.mrf.mxu0
        %v806 = vadd.f32 0.0, %v805
        %v807 = vpop.f32.mrf.mxu0
        %v808 = vadd.f32 0.0, %v807
        %809 = vmatmul.bf16.gmra.mxu0 %v712
        %v810 = vpop.f32.mrf.mxu0
        %v811 = vadd.f32 0.0, %v810
        %v812 = vpop.f32.mrf.mxu0
        %v813 = vadd.f32 0.0, %v812
        %814 = vmatmul.bf16.gmra.mxu0 %v715
        %v815 = vpop.f32.mrf.mxu0
        %v816 = vadd.f32 0.0, %v815
        %v817 = vpop.f32.mrf.mxu0
        %v818 = vadd.f32 0.0, %v817
        %819 = vmatmul.bf16.gmra.mxu0 %v718
        %v820 = vpop.f32.mrf.mxu0
        %v821 = vadd.f32 0.0, %v820
        %v822 = vpop.f32.mrf.mxu0
        %v823 = vadd.f32 0.0, %v822
        %824 = vdwg.mxu0
        %v825 = vmul.f32 %v737, %v786
        %v826 = vmul.f32 %v739, %v788
        %v827 = vmul.f32 %v742, %v791
        %v828 = vmul.f32 %v744, %v793
        %v829 = vmul.f32 %v747, %v796
        %v830 = vmul.f32 %v749, %v798
        %v831 = vmul.f32 %v752, %v801
        %v832 = vmul.f32 %v754, %v803
        %v833 = vmul.f32 %v757, %v806
        %v834 = vmul.f32 %v759, %v808
        %v835 = vmul.f32 %v762, %v811
        %v836 = vmul.f32 %v764, %v813
        %v837 = vmul.f32 %v767, %v816
        %v838 = vmul.f32 %v769, %v818
        %v839 = vmul.f32 %v772, %v821
        %v840 = vmul.f32 %v774, %v823
        %841 = vadd.xlane.f32.xlu0 %v825
        %v842 = vpop.xlane.xlu0 %841
        %843 = vadd.xlane.f32.xlu0 %v826
        %v844 = vpop.xlane.xlu0 %843
        %845 = vadd.xlane.f32.xlu0 %v827
        %v846 = vpop.xlane.xlu0 %845
        %847 = vadd.xlane.f32.xlu0 %v828
        %v848 = vpop.xlane.xlu0 %847
        %849 = vadd.xlane.f32.xlu0 %v829
        %v850 = vpop.xlane.xlu0 %849
        %851 = vadd.xlane.f32.xlu0 %v830
        %v852 = vpop.xlane.xlu0 %851
        %853 = vadd.xlane.f32.xlu0 %v831
        %v854 = vpop.xlane.xlu0 %853
        %855 = vadd.xlane.f32.xlu0 %v832
        %v856 = vpop.xlane.xlu0 %855
        %857 = vadd.xlane.f32.xlu0 %v833
        %v858 = vpop.xlane.xlu0 %857
        %859 = vadd.xlane.f32.xlu0 %v834
        %v860 = vpop.xlane.xlu0 %859
        %861 = vadd.xlane.f32.xlu0 %v835
        %v862 = vpop.xlane.xlu0 %861
        %863 = vadd.xlane.f32.xlu0 %v836
        %v864 = vpop.xlane.xlu0 %863
        %865 = vadd.xlane.f32.xlu0 %v837
        %v866 = vpop.xlane.xlu0 %865
        %867 = vadd.xlane.f32.xlu0 %v838
        %v868 = vpop.xlane.xlu0 %867
        %869 = vadd.xlane.f32.xlu0 %v839
        %v870 = vpop.xlane.xlu0 %869
        %871 = vadd.xlane.f32.xlu0 %v840
        %v872 = vpop.xlane.xlu0 %871
        %v873 = vld [vmem:[%s2] sm:$0x1]
        %v875 = vperm.slane %v873, 0
        %v877 = vmul.f32 %v649, %v875
        %v878 = vmul.f32 %v650, %v875
        %v879 = vmul.f32 %v651, %v875
        %v880 = vmul.f32 %v652, %v875
        %v881 = vmul.f32 %v653, %v875
        %v882 = vmul.f32 %v654, %v875
        %v883 = vmul.f32 %v655, %v875
        %v884 = vmul.f32 %v656, %v875
        %v885 = vmul.f32 %v657, %v875
        %v886 = vmul.f32 %v658, %v875
        %v887 = vmul.f32 %v659, %v875
        %v888 = vmul.f32 %v660, %v875
        %v889 = vmul.f32 %v661, %v875
        %v890 = vmul.f32 %v662, %v875
        %v891 = vmul.f32 %v663, %v875
        %v892 = vmul.f32 %v664, %v875
        %v893 = vsel %vm695, %v877, 0.0
        %894 = vadd.xlane.f32.xlu0 %v893
        %v895 = vpop.xlane.xlu0 %894
        %v896 = vsel %vm695, %v878, 0.0
        %897 = vadd.xlane.f32.xlu0 %v896
        %v898 = vpop.xlane.xlu0 %897
        %v899 = vsel %vm695, %v879, 0.0
        %900 = vadd.xlane.f32.xlu0 %v899
        %v901 = vpop.xlane.xlu0 %900
        %v902 = vsel %vm695, %v880, 0.0
        %903 = vadd.xlane.f32.xlu0 %v902
        %v904 = vpop.xlane.xlu0 %903
        %v905 = vsel %vm695, %v881, 0.0
        %906 = vadd.xlane.f32.xlu0 %v905
        %v907 = vpop.xlane.xlu0 %906
        %v908 = vsel %vm695, %v882, 0.0
        %909 = vadd.xlane.f32.xlu0 %v908
        %v910 = vpop.xlane.xlu0 %909
        %v911 = vsel %vm695, %v883, 0.0
        %912 = vadd.xlane.f32.xlu0 %v911
        %v913 = vpop.xlane.xlu0 %912
        %v914 = vsel %vm695, %v884, 0.0
        %915 = vadd.xlane.f32.xlu0 %v914
        %v916 = vpop.xlane.xlu0 %915
        %v917 = vsel %vm695, %v885, 0.0
        %918 = vadd.xlane.f32.xlu0 %v917
        %v919 = vpop.xlane.xlu0 %918
        %v920 = vsel %vm695, %v886, 0.0
        %921 = vadd.xlane.f32.xlu0 %v920
        %v922 = vpop.xlane.xlu0 %921
        %v923 = vsel %vm695, %v887, 0.0
        %924 = vadd.xlane.f32.xlu0 %v923
        %v925 = vpop.xlane.xlu0 %924
        %v926 = vsel %vm695, %v888, 0.0
        %927 = vadd.xlane.f32.xlu0 %v926
        %v928 = vpop.xlane.xlu0 %927
        %v929 = vsel %vm695, %v889, 0.0
        %930 = vadd.xlane.f32.xlu0 %v929
        %v931 = vpop.xlane.xlu0 %930
        %v932 = vsel %vm695, %v890, 0.0
        %933 = vadd.xlane.f32.xlu0 %v932
        %v934 = vpop.xlane.xlu0 %933
        %v935 = vsel %vm695, %v891, 0.0
        %936 = vadd.xlane.f32.xlu0 %v935
        %v937 = vpop.xlane.xlu0 %936
        %v938 = vsel %vm695, %v892, 0.0
        %939 = vadd.xlane.f32.xlu0 %v938
        %v940 = vpop.xlane.xlu0 %939
        %v941 = vadd.f32 %v842, %v895
        %v942 = vadd.f32 %v844, %v898
        %v943 = vadd.f32 %v846, %v901
        %v944 = vadd.f32 %v848, %v904
        %v945 = vadd.f32 %v850, %v907
        %v946 = vadd.f32 %v852, %v910
        %v947 = vadd.f32 %v854, %v913
        %v948 = vadd.f32 %v856, %v916
        %v949 = vadd.f32 %v858, %v919
        %v950 = vadd.f32 %v860, %v922
        %v951 = vadd.f32 %v862, %v925
        %v952 = vadd.f32 %v864, %v928
        %v953 = vadd.f32 %v866, %v931
        %v954 = vadd.f32 %v868, %v934
        %v955 = vadd.f32 %v870, %v937
        %v956 = vadd.f32 %v872, %v940
        %s957 = sld [smem:[#allocation2]]
        %v958 = vstv %s957
        %v959 = vadd.f32 %v941, %v958
        %v960 = vadd.f32 %v942, %v958
        %v961 = vadd.f32 %v943, %v958
        %v962 = vadd.f32 %v944, %v958
        %v963 = vadd.f32 %v945, %v958
        %v964 = vadd.f32 %v946, %v958
        %v965 = vadd.f32 %v947, %v958
        %v966 = vadd.f32 %v948, %v958
        %v967 = vadd.f32 %v949, %v958
        %v968 = vadd.f32 %v950, %v958
        %v969 = vadd.f32 %v951, %v958
        %v970 = vadd.f32 %v952, %v958
        %v971 = vadd.f32 %v953, %v958
        %v972 = vadd.f32 %v954, %v958
        %v973 = vadd.f32 %v955, %v958
        %v974 = vadd.f32 %v956, %v958
        %v975 = vxor.u32 %v959, 2147483648
        %v976 = vxor.u32 %v960, 2147483648
        %v977 = vxor.u32 %v961, 2147483648
        %v978 = vxor.u32 %v962, 2147483648
        %v979 = vxor.u32 %v963, 2147483648
        %v980 = vxor.u32 %v964, 2147483648
        %v981 = vxor.u32 %v965, 2147483648
        %v982 = vxor.u32 %v966, 2147483648
        %v983 = vxor.u32 %v967, 2147483648
        %v984 = vxor.u32 %v968, 2147483648
        %v985 = vxor.u32 %v969, 2147483648
        %v986 = vxor.u32 %v970, 2147483648
        %v987 = vxor.u32 %v971, 2147483648
        %v988 = vxor.u32 %v972, 2147483648
        %v989 = vxor.u32 %v973, 2147483648
        %v990 = vxor.u32 %v974, 2147483648
        %v991 = vmul.f32 %v975, 1.442695
        %v992 = vpow.pop %v991
        %v993 = vmul.f32 %v976, 1.442695
        %v994 = vpow.pop %v993
        %v995 = vmul.f32 %v977, 1.442695
        %v996 = vpow.pop %v995
        %v997 = vmul.f32 %v978, 1.442695
        %v998 = vpow.pop %v997
        %v999 = vmul.f32 %v979, 1.442695
        %v1000 = vpow.pop %v999
        %v1001 = vmul.f32 %v980, 1.442695
        %v1002 = vpow.pop %v1001
        %v1003 = vmul.f32 %v981, 1.442695
        %v1004 = vpow.pop %v1003
        %v1005 = vmul.f32 %v982, 1.442695
        %v1006 = vpow.pop %v1005
        %v1007 = vmul.f32 %v983, 1.442695
        %v1008 = vpow.pop %v1007
        %v1009 = vmul.f32 %v984, 1.442695
        %v1010 = vpow.pop %v1009
        %v1011 = vmul.f32 %v985, 1.442695
        %v1012 = vpow.pop %v1011
        %v1013 = vmul.f32 %v986, 1.442695
        %v1014 = vpow.pop %v1013
        %v1015 = vmul.f32 %v987, 1.442695
        %v1016 = vpow.pop %v1015
        %v1017 = vmul.f32 %v988, 1.442695
        %v1018 = vpow.pop %v1017
        %v1019 = vmul.f32 %v989, 1.442695
        %v1020 = vpow.pop %v1019
        %v1021 = vmul.f32 %v990, 1.442695
        %v1022 = vpow.pop %v1021
        %v1023 = vadd.f32 %v992, 1.0
        %v1024 = vadd.f32 %v994, 1.0
        %v1025 = vadd.f32 %v996, 1.0
        %v1026 = vadd.f32 %v998, 1.0
        %v1027 = vadd.f32 %v1000, 1.0
        %v1028 = vadd.f32 %v1002, 1.0
        %v1029 = vadd.f32 %v1004, 1.0
        %v1030 = vadd.f32 %v1006, 1.0
        %v1031 = vadd.f32 %v1008, 1.0
        %v1032 = vadd.f32 %v1010, 1.0
        %v1033 = vadd.f32 %v1012, 1.0
        %v1034 = vadd.f32 %v1014, 1.0
        %v1035 = vadd.f32 %v1016, 1.0
        %v1036 = vadd.f32 %v1018, 1.0
        %v1037 = vadd.f32 %v1020, 1.0
        %v1038 = vadd.f32 %v1022, 1.0
        %v1039 = vrcp.pop %v1023
        %v1040 = vmul.f32 %v1023, %v1039
        %v1041 = vsub.f32 1.0, %v1040
        %v1042 = vmul.f32 %v1039, %v1041
        %v1043 = vadd.f32 %v1039, %v1042
        %vm1044 = vweird.f32 %v1023
        %vm1045 = vweird.f32 %v1039
        %vm1046 = vmor %vm1044, %vm1045
        %v1047 = vsel %vm1046, %v1039, %v1043
        %v1048 = vand.u32 2147483647, %v1023
        %vm1049 = vcmp.eq.f32.partialorder %v1048, 8.507059e+37
        %v1050 = vand.u32 %v1023, 2147483648
        %v1051 = vor.u32 1.1754944e-38, %v1050
        %v1052 = vsel %vm1049, %v1051, %v1047
        %v1053 = vmul.f32 1.0, %v1052
        %v1054 = vrcp.pop %v1024
        %v1055 = vmul.f32 %v1024, %v1054
        %v1056 = vsub.f32 1.0, %v1055
        %v1057 = vmul.f32 %v1054, %v1056
        %v1058 = vadd.f32 %v1054, %v1057
        %vm1059 = vweird.f32 %v1024
        %vm1060 = vweird.f32 %v1054
        %vm1061 = vmor %vm1059, %vm1060
        %v1062 = vsel %vm1061, %v1054, %v1058
        %v1063 = vand.u32 2147483647, %v1024
        %vm1064 = vcmp.eq.f32.partialorder %v1063, 8.507059e+37
        %v1065 = vand.u32 %v1024, 2147483648
        %v1066 = vor.u32 1.1754944e-38, %v1065
        %v1067 = vsel %vm1064, %v1066, %v1062
        %v1068 = vmul.f32 1.0, %v1067
        %v1069 = vrcp.pop %v1025
        %v1070 = vmul.f32 %v1025, %v1069
        %v1071 = vsub.f32 1.0, %v1070
        %v1072 = vmul.f32 %v1069, %v1071
        %v1073 = vadd.f32 %v1069, %v1072
        %vm1074 = vweird.f32 %v1025
        %vm1075 = vweird.f32 %v1069
        %vm1076 = vmor %vm1074, %vm1075
        %v1077 = vsel %vm1076, %v1069, %v1073
        %v1078 = vand.u32 2147483647, %v1025
        %vm1079 = vcmp.eq.f32.partialorder %v1078, 8.507059e+37
        %v1080 = vand.u32 %v1025, 2147483648
        %v1081 = vor.u32 1.1754944e-38, %v1080
        %v1082 = vsel %vm1079, %v1081, %v1077
        %v1083 = vmul.f32 1.0, %v1082
        %v1084 = vrcp.pop %v1026
        %v1085 = vmul.f32 %v1026, %v1084
        %v1086 = vsub.f32 1.0, %v1085
        %v1087 = vmul.f32 %v1084, %v1086
        %v1088 = vadd.f32 %v1084, %v1087
        %vm1089 = vweird.f32 %v1026
        %vm1090 = vweird.f32 %v1084
        %vm1091 = vmor %vm1089, %vm1090
        %v1092 = vsel %vm1091, %v1084, %v1088
        %v1093 = vand.u32 2147483647, %v1026
        %vm1094 = vcmp.eq.f32.partialorder %v1093, 8.507059e+37
        %v1095 = vand.u32 %v1026, 2147483648
        %v1096 = vor.u32 1.1754944e-38, %v1095
        %v1097 = vsel %vm1094, %v1096, %v1092
        %v1098 = vmul.f32 1.0, %v1097
        %v1099 = vrcp.pop %v1027
        %v1100 = vmul.f32 %v1027, %v1099
        %v1101 = vsub.f32 1.0, %v1100
        %v1102 = vmul.f32 %v1099, %v1101
        %v1103 = vadd.f32 %v1099, %v1102
        %vm1104 = vweird.f32 %v1027
        %vm1105 = vweird.f32 %v1099
        %vm1106 = vmor %vm1104, %vm1105
        %v1107 = vsel %vm1106, %v1099, %v1103
        %v1108 = vand.u32 2147483647, %v1027
        %vm1109 = vcmp.eq.f32.partialorder %v1108, 8.507059e+37
        %v1110 = vand.u32 %v1027, 2147483648
        %v1111 = vor.u32 1.1754944e-38, %v1110
        %v1112 = vsel %vm1109, %v1111, %v1107
        %v1113 = vmul.f32 1.0, %v1112
        %v1114 = vrcp.pop %v1028
        %v1115 = vmul.f32 %v1028, %v1114
        %v1116 = vsub.f32 1.0, %v1115
        %v1117 = vmul.f32 %v1114, %v1116
        %v1118 = vadd.f32 %v1114, %v1117
        %vm1119 = vweird.f32 %v1028
        %vm1120 = vweird.f32 %v1114
        %vm1121 = vmor %vm1119, %vm1120
        %v1122 = vsel %vm1121, %v1114, %v1118
        %v1123 = vand.u32 2147483647, %v1028
        %vm1124 = vcmp.eq.f32.partialorder %v1123, 8.507059e+37
        %v1125 = vand.u32 %v1028, 2147483648
        %v1126 = vor.u32 1.1754944e-38, %v1125
        %v1127 = vsel %vm1124, %v1126, %v1122
        %v1128 = vmul.f32 1.0, %v1127
        %v1129 = vrcp.pop %v1029
        %v1130 = vmul.f32 %v1029, %v1129
        %v1131 = vsub.f32 1.0, %v1130
        %v1132 = vmul.f32 %v1129, %v1131
        %v1133 = vadd.f32 %v1129, %v1132
        %vm1134 = vweird.f32 %v1029
        %vm1135 = vweird.f32 %v1129
        %vm1136 = vmor %vm1134, %vm1135
        %v1137 = vsel %vm1136, %v1129, %v1133
        %v1138 = vand.u32 2147483647, %v1029
        %vm1139 = vcmp.eq.f32.partialorder %v1138, 8.507059e+37
        %v1140 = vand.u32 %v1029, 2147483648
        %v1141 = vor.u32 1.1754944e-38, %v1140
        %v1142 = vsel %vm1139, %v1141, %v1137
        %v1143 = vmul.f32 1.0, %v1142
        %v1144 = vrcp.pop %v1030
        %v1145 = vmul.f32 %v1030, %v1144
        %v1146 = vsub.f32 1.0, %v1145
        %v1147 = vmul.f32 %v1144, %v1146
        %v1148 = vadd.f32 %v1144, %v1147
        %vm1149 = vweird.f32 %v1030
        %vm1150 = vweird.f32 %v1144
        %vm1151 = vmor %vm1149, %vm1150
        %v1152 = vsel %vm1151, %v1144, %v1148
        %v1153 = vand.u32 2147483647, %v1030
        %vm1154 = vcmp.eq.f32.partialorder %v1153, 8.507059e+37
        %v1155 = vand.u32 %v1030, 2147483648
        %v1156 = vor.u32 1.1754944e-38, %v1155
        %v1157 = vsel %vm1154, %v1156, %v1152
        %v1158 = vmul.f32 1.0, %v1157
        %v1159 = vrcp.pop %v1031
        %v1160 = vmul.f32 %v1031, %v1159
        %v1161 = vsub.f32 1.0, %v1160
        %v1162 = vmul.f32 %v1159, %v1161
        %v1163 = vadd.f32 %v1159, %v1162
        %vm1164 = vweird.f32 %v1031
        %vm1165 = vweird.f32 %v1159
        %vm1166 = vmor %vm1164, %vm1165
        %v1167 = vsel %vm1166, %v1159, %v1163
        %v1168 = vand.u32 2147483647, %v1031
        %vm1169 = vcmp.eq.f32.partialorder %v1168, 8.507059e+37
        %v1170 = vand.u32 %v1031, 2147483648
        %v1171 = vor.u32 1.1754944e-38, %v1170
        %v1172 = vsel %vm1169, %v1171, %v1167
        %v1173 = vmul.f32 1.0, %v1172
        %v1174 = vrcp.pop %v1032
        %v1175 = vmul.f32 %v1032, %v1174
        %v1176 = vsub.f32 1.0, %v1175
        %v1177 = vmul.f32 %v1174, %v1176
        %v1178 = vadd.f32 %v1174, %v1177
        %vm1179 = vweird.f32 %v1032
        %vm1180 = vweird.f32 %v1174
        %vm1181 = vmor %vm1179, %vm1180
        %v1182 = vsel %vm1181, %v1174, %v1178
        %v1183 = vand.u32 2147483647, %v1032
        %vm1184 = vcmp.eq.f32.partialorder %v1183, 8.507059e+37
        %v1185 = vand.u32 %v1032, 2147483648
        %v1186 = vor.u32 1.1754944e-38, %v1185
        %v1187 = vsel %vm1184, %v1186, %v1182
        %v1188 = vmul.f32 1.0, %v1187
        %v1189 = vrcp.pop %v1033
        %v1190 = vmul.f32 %v1033, %v1189
        %v1191 = vsub.f32 1.0, %v1190
        %v1192 = vmul.f32 %v1189, %v1191
        %v1193 = vadd.f32 %v1189, %v1192
        %vm1194 = vweird.f32 %v1033
        %vm1195 = vweird.f32 %v1189
        %vm1196 = vmor %vm1194, %vm1195
        %v1197 = vsel %vm1196, %v1189, %v1193
        %v1198 = vand.u32 2147483647, %v1033
        %vm1199 = vcmp.eq.f32.partialorder %v1198, 8.507059e+37
        %v1200 = vand.u32 %v1033, 2147483648
        %v1201 = vor.u32 1.1754944e-38, %v1200
        %v1202 = vsel %vm1199, %v1201, %v1197
        %v1203 = vmul.f32 1.0, %v1202
        %v1204 = vrcp.pop %v1034
        %v1205 = vmul.f32 %v1034, %v1204
        %v1206 = vsub.f32 1.0, %v1205
        %v1207 = vmul.f32 %v1204, %v1206
        %v1208 = vadd.f32 %v1204, %v1207
        %vm1209 = vweird.f32 %v1034
        %vm1210 = vweird.f32 %v1204
        %vm1211 = vmor %vm1209, %vm1210
        %v1212 = vsel %vm1211, %v1204, %v1208
        %v1213 = vand.u32 2147483647, %v1034
        %vm1214 = vcmp.eq.f32.partialorder %v1213, 8.507059e+37
        %v1215 = vand.u32 %v1034, 2147483648
        %v1216 = vor.u32 1.1754944e-38, %v1215
        %v1217 = vsel %vm1214, %v1216, %v1212
        %v1218 = vmul.f32 1.0, %v1217
        %v1219 = vrcp.pop %v1035
        %v1220 = vmul.f32 %v1035, %v1219
        %v1221 = vsub.f32 1.0, %v1220
        %v1222 = vmul.f32 %v1219, %v1221
        %v1223 = vadd.f32 %v1219, %v1222
        %vm1224 = vweird.f32 %v1035
        %vm1225 = vweird.f32 %v1219
        %vm1226 = vmor %vm1224, %vm1225
        %v1227 = vsel %vm1226, %v1219, %v1223
        %v1228 = vand.u32 2147483647, %v1035
        %vm1229 = vcmp.eq.f32.partialorder %v1228, 8.507059e+37
        %v1230 = vand.u32 %v1035, 2147483648
        %v1231 = vor.u32 1.1754944e-38, %v1230
        %v1232 = vsel %vm1229, %v1231, %v1227
        %v1233 = vmul.f32 1.0, %v1232
        %v1234 = vrcp.pop %v1036
        %v1235 = vmul.f32 %v1036, %v1234
        %v1236 = vsub.f32 1.0, %v1235
        %v1237 = vmul.f32 %v1234, %v1236
        %v1238 = vadd.f32 %v1234, %v1237
        %vm1239 = vweird.f32 %v1036
        %vm1240 = vweird.f32 %v1234
        %vm1241 = vmor %vm1239, %vm1240
        %v1242 = vsel %vm1241, %v1234, %v1238
        %v1243 = vand.u32 2147483647, %v1036
        %vm1244 = vcmp.eq.f32.partialorder %v1243, 8.507059e+37
        %v1245 = vand.u32 %v1036, 2147483648
        %v1246 = vor.u32 1.1754944e-38, %v1245
        %v1247 = vsel %vm1244, %v1246, %v1242
        %v1248 = vmul.f32 1.0, %v1247
        %v1249 = vrcp.pop %v1037
        %v1250 = vmul.f32 %v1037, %v1249
        %v1251 = vsub.f32 1.0, %v1250
        %v1252 = vmul.f32 %v1249, %v1251
        %v1253 = vadd.f32 %v1249, %v1252
        %vm1254 = vweird.f32 %v1037
        %vm1255 = vweird.f32 %v1249
        %vm1256 = vmor %vm1254, %vm1255
        %v1257 = vsel %vm1256, %v1249, %v1253
        %v1258 = vand.u32 2147483647, %v1037
        %vm1259 = vcmp.eq.f32.partialorder %v1258, 8.507059e+37
        %v1260 = vand.u32 %v1037, 2147483648
        %v1261 = vor.u32 1.1754944e-38, %v1260
        %v1262 = vsel %vm1259, %v1261, %v1257
        %v1263 = vmul.f32 1.0, %v1262
        %v1264 = vrcp.pop %v1038
        %v1265 = vmul.f32 %v1038, %v1264
        %v1266 = vsub.f32 1.0, %v1265
        %v1267 = vmul.f32 %v1264, %v1266
        %v1268 = vadd.f32 %v1264, %v1267
        %vm1269 = vweird.f32 %v1038
        %vm1270 = vweird.f32 %v1264
        %vm1271 = vmor %vm1269, %vm1270
        %v1272 = vsel %vm1271, %v1264, %v1268
        %v1273 = vand.u32 2147483647, %v1038
        %vm1274 = vcmp.eq.f32.partialorder %v1273, 8.507059e+37
        %v1275 = vand.u32 %v1038, 2147483648
        %v1276 = vor.u32 1.1754944e-38, %v1275
        %v1277 = vsel %vm1274, %v1276, %v1272
        %v1278 = vmul.f32 1.0, %v1277
        %v1295 = vperm.slane %v1053, %v216
        %v1296 = vadd.s32 %v216, 4294967288
        %v1297 = vperm.slane %v1068, %v1296
        %vm1298 = vcmask 130112
        %v1299 = vsel %vm1298, %v1297, %v1295
        %v1300 = vadd.s32 %v216, 4294967280
        %v1301 = vperm.slane %v1083, %v1300
        %vm1302 = vcmask 195712
        %v1303 = vsel %vm1302, %v1301, %v1299
        %v1304 = vadd.s32 %v216, 4294967272
        %v1305 = vperm.slane %v1098, %v1304
        %vm1306 = vcmask 261312
        %v1307 = vsel %vm1306, %v1305, %v1303
        %v1308 = vadd.s32 %v216, 4294967264
        %v1309 = vperm.slane %v1113, %v1308
        %vm1310 = vcmask 326912
        %v1311 = vsel %vm1310, %v1309, %v1307
        %v1312 = vadd.s32 %v216, 4294967256
        %v1313 = vperm.slane %v1128, %v1312
        %vm1314 = vcmask 392512
        %v1315 = vsel %vm1314, %v1313, %v1311
        %v1316 = vadd.s32 %v216, 4294967248
        %v1317 = vperm.slane %v1143, %v1316
        %vm1318 = vcmask 458112
        %v1319 = vsel %vm1318, %v1317, %v1315
        %v1320 = vadd.s32 %v216, 4294967240
        %v1321 = vperm.slane %v1158, %v1320
        %vm1322 = vcmask 523712
        %v1323 = vsel %vm1322, %v1321, %v1319
        %v1324 = vadd.s32 %v216, 4294967232
        %v1325 = vperm.slane %v1173, %v1324
        %vm1326 = vcmask 589312
        %v1327 = vsel %vm1326, %v1325, %v1323
        %v1328 = vadd.s32 %v216, 4294967224
        %v1329 = vperm.slane %v1188, %v1328
        %vm1330 = vcmask 654912
        %v1331 = vsel %vm1330, %v1329, %v1327
        %v1332 = vadd.s32 %v216, 4294967216
        %v1333 = vperm.slane %v1203, %v1332
        %vm1334 = vcmask 720512
        %v1335 = vsel %vm1334, %v1333, %v1331
        %v1336 = vadd.s32 %v216, 4294967208
        %v1337 = vperm.slane %v1218, %v1336
        %vm1338 = vcmask 786112
        %v1339 = vsel %vm1338, %v1337, %v1335
        %v1340 = vadd.s32 %v216, 4294967200
        %v1341 = vperm.slane %v1233, %v1340
        %vm1342 = vcmask 851712
        %v1343 = vsel %vm1342, %v1341, %v1339
        %v1344 = vadd.s32 %v216, 4294967192
        %v1345 = vperm.slane %v1248, %v1344
        %vm1346 = vcmask 917312
        %v1347 = vsel %vm1346, %v1345, %v1343
        %v1348 = vadd.s32 %v216, 4294967184
        %v1349 = vperm.slane %v1263, %v1348
        %vm1350 = vcmask 982912
        %v1351 = vsel %vm1350, %v1349, %v1347
        %v1352 = vadd.s32 %v216, 4294967176
        %v1353 = vperm.slane %v1278, %v1352
        %vm1354 = vcmask 1048512
        %v1355 = vsel %vm1354, %v1353, %v1351
        %1357 = vst [vmem:[%s191] sm:$0x1] %v1355
        %s1358 = sand.u32 %s116, 1
        %s1359 = scalar_lea.sflag [#allocation4], %s1358
        %s1360 = sand.u32 %s116, 1
        %s1361 = scalar_lea.vmem [#allocation3], %s1360
        // Predicated region
        $region37: #{tpu_custom_call.1} parent=35 // pred_check
          %p1362 = pneg %p126
        $region38: #{tpu_custom_call.1} parent=35 // pred_check_branch
          %1364 = sbr.rel (%p1362) target = $region40
        $region39: #{tpu_custom_call.1} parent=35 // pred_region
          %1366 = vsyncadd %s1359, 0
          %s1367 = scalar_lea.hbm %s4, %s19
          %s1369 = sshll.u32 %s1361, 4
          %s1370 = int_to_ptr.vmem [resolvable:$true] %s1369
          %s1371 = sshll.u32 %s1367, 4
          %s1372 = int_to_ptr.hbm [resolvable:$true] %s1371
          %1374 = dma.vmem_to_hbm [thread:$0]  %s1370, 16, %s1372, %s1359
        $region40: #{tpu_custom_call.1} parent=35 // pred_fallthru
          _
      $region36: #{tpu_custom_call.1} parent=5 // pred_fallthru
        _
      %p1375 = scmp.le.s32.totalorder 2, %s14
      // Predicated region
      $region41: #{tpu_custom_call.1} parent=5 // pred_check
        %p1376 = pneg %p1375
      $region42: #{tpu_custom_call.1} parent=5 // pred_check_branch
        %1378 = sbr.rel (%p1376) target = $region44
      $region43: #{tpu_custom_call.1} parent=5 // pred_region
        %s1379 = ssub.s32 %s14, 2
        // Predicated region
        $region45: #{tpu_custom_call.1} parent=43 // pred_check
          %p1380 = pneg %p132
        $region46: #{tpu_custom_call.1} parent=43 // pred_check_branch
          %1382 = sbr.rel (%p1380) target = $region48
        $region47: #{tpu_custom_call.1} parent=43 // pred_region
          %s1383 = sand.u32 %s117, 1
          %s1384 = scalar_lea.sflag [#allocation4], %s1383
          %s1385 = sand.u32 %s117, 1
          %s1386 = scalar_lea.vmem [#allocation3], %s1385
          %1388 = dma.done %s1384, 16
        $region48: #{tpu_custom_call.1} parent=43 // pred_fallthru
          _
      $region44: #{tpu_custom_call.1} parent=5 // pred_fallthru
        _
    $region6: #{tpu_custom_call.1} parent=1 // loop_footer
      %s18 = sadd.s32 1, %s14
    $region7: #{tpu_custom_call.1} parent=1 // loop_footer_branch
      %13 = sbr.rel target = $region3
    $region8: #{tpu_custom_call.1} parent=1 // loop_exit
      _
    %1389 = vsyncpa [#allocation4], 1
    %s1390 = scalar_lea.sflag [#allocation4], 1
    %1391 = vsyncpa %s1390, 1

</llo_original>
